<compile_context>
chip_gen: v6e
topology: v6e:2x2x1
jax: 0.10.0
libtpu: 0.0.40
codegen_flags: <defaults>
</compile_context>

<pallas_src>
import functools

import jax
import jax.numpy as jnp
from jax import lax
from jax.experimental import pallas as pl
from jax.experimental.pallas import tpu as pltpu


# --------------------------------------------------------------------------- #
# Pallas kernel: one streaming elementwise pass over a (b_blk, t_blk, F) tile. #
# --------------------------------------------------------------------------- #
def _specaug_kernel(params_ref, mvals_ref, x_ref, o_ref, *, m_F, m_T):
    """params_ref : SMEM int32[2*m_F + 2*m_T] = [f0_0, f_0, ..., t0_0, t_0, ...]
       mvals_ref  : SMEM float32[2]           = [freq fill value, time fill value]
       x_ref/o_ref: VMEM (b_blk, t_blk, F) tile of the (B, T, F) spectrogram.
    """
    x = x_ref[...]
    blk_shape = x_ref.shape              # static (b_blk, t_blk, F)
    t_blk = blk_shape[1]

    # ---- frequency masks (lane axis), fused into a single select ----
    if m_F:
        freq_ids = lax.broadcasted_iota(jnp.int32, blk_shape, 2)
        fmask = None
        for i in range(m_F):
            f0 = params_ref[2 * i]
            fw = params_ref[2 * i + 1]
            m = (freq_ids >= f0) & (freq_ids < f0 + fw)
            fmask = m if fmask is None else (fmask | m)
        x = jnp.where(fmask, mvals_ref[0].astype(x.dtype), x)

    # ---- time masks (sublane axis), fused into a single select ----
    if m_T:
        t_off = pl.program_id(1) * t_blk
        time_ids = lax.broadcasted_iota(jnp.int32, blk_shape, 1) + t_off
        tmask = None
        for i in range(m_T):
            t0 = params_ref[2 * m_F + 2 * i]
            tw = params_ref[2 * m_F + 2 * i + 1]
            m = (time_ids >= t0) & (time_ids < t0 + tw)
            tmask = m if tmask is None else (tmask | m)
        x = jnp.where(tmask, mvals_ref[1].astype(x.dtype), x)

    o_ref[...] = x


# Plain-jnp application of the same masks / fill values (used as a self-check).
def _reference_apply(img, params, mvals, m_F, m_T):
    _, T, F = img.shape
    fid = jnp.arange(F, dtype=jnp.int32)[None, None, :]
    tid = jnp.arange(T, dtype=jnp.int32)[None, :, None]
    x = img
    for i in range(m_F):
        f0, fw = params[2 * i], params[2 * i + 1]
        x = jnp.where((fid >= f0) & (fid < f0 + fw), mvals[0].astype(x.dtype), x)
    for i in range(m_T):
        t0, tw = params[2 * m_F + 2 * i], params[2 * m_F + 2 * i + 1]
        x = jnp.where((tid >= t0) & (tid < t0 + tw), mvals[1].astype(x.dtype), x)
    return x


class SpecAugment:
    """JAX/Pallas port of the reference SpecAugment module (forward pass only)."""

    _POLICIES = {
        "LB": (80, 27, 1, 100, 1.0, 1),
        "LD": (80, 27, 2, 100, 1.0, 2),
        "SM": (40, 15, 2, 70, 0.2, 2),
        "SS": (40, 27, 2, 70, 0.2, 2),
        "icbhi_sup": (0, 20, 2, 50, 1.0, 2),
        "icbhi_ast_sup": (0, 48, 2, 160, 1.0, 2),
    }

    def __init__(self, policy="icbhi_sup", mask="mean"):
        self.policy = policy
        self.mask = mask
        self.W, self.F, self.m_F, self.T, self.p, self.m_T = self._POLICIES[policy]
        # Jitted entry points: no host<->device syncs anywhere on the hot path.
        self._jit_forward = jax.jit(self._forward)
        self._jit_augment = jax.jit(self._augment_from_key)

    # ---------- mask-parameter generation (device-side, traced, jittable) ----------
    def _draw_mask_params(self, key, T, F):
        kfw, kfo, ktw, kto = jax.random.split(key, 4)
        f_w = jnp.floor(jax.random.uniform(kfw, (self.m_F,), minval=0.0,
                                           maxval=float(self.F))).astype(jnp.int32)
        f_w = jnp.minimum(f_w, F)        # clamp: policy F may exceed the tensor's F
        f_o = jax.random.randint(kfo, (self.m_F,), 0, F - f_w + 1).astype(jnp.int32)
        t_w = jnp.floor(jax.random.uniform(ktw, (self.m_T,), minval=0.0,
                                           maxval=float(self.T))).astype(jnp.int32)
        t_w = jnp.minimum(t_w, T)
        t_o = jax.random.randint(kto, (self.m_T,), 0, T - t_w + 1).astype(jnp.int32)
        fparams = jnp.stack([f_o, f_w], axis=1).reshape(-1)
        tparams = jnp.stack([t_o, t_w], axis=1).reshape(-1)
        return jnp.concatenate([fparams, tparams]).astype(jnp.int32)

    # ---------- fill values: ONE fused XLA reduction, hoisted out of the kernel ----------
    def _mask_values(self, img, params):
        if self.mask != "mean":          # 'zero'
            return jnp.zeros((2,), jnp.float32)
        B, T, F = img.shape
        col_sum = jnp.sum(img.astype(jnp.float32), axis=(0, 1))    # (F,), single pass
        total = jnp.sum(col_sum)
        n = jnp.float32(B * T * F)
        mean_before = total / n                                     # freq-mask fill value
        fid = jnp.arange(F, dtype=jnp.int32)
        colmask = jnp.zeros((F,), jnp.bool_)
        for i in range(self.m_F):
            f0 = params[2 * i]
            fw = params[2 * i + 1]
            colmask = colmask | ((fid >= f0) & (fid < f0 + fw))
        s_masked = jnp.sum(jnp.where(colmask, col_sum, 0.0))
        n_masked = jnp.float32(B * T) * jnp.sum(colmask).astype(jnp.float32)
        # Mean AFTER freq masking, derived analytically (no second full-tensor reduce).
        mean_after = (total - s_masked + mean_before * n_masked) / n
        return jnp.stack([mean_before, mean_after]).astype(jnp.float32)

    # ---------- the Pallas call (tiled, double-buffered streaming pass) ----------
    def _augment_impl(self, img, params, mvals):
        B, T, F = img.shape
        itemsize = jnp.dtype(img.dtype).itemsize
        row_bytes = F * itemsize
        # ~1 MiB per block buffer -> in+out double-buffered ~4 MiB VMEM: safe from
        # v5e (16 MiB scoped default) through v7x (64 MiB physical), while keeping
        # >= 2048 rows/block for F=128 f32 (well past the ~512-row roofline knee).
        target = 1 << 20
        rows = max(8, target // row_bytes)
        if T * row_bytes <= target:
            t_blk = T
            b_blk = max(1, min(B, rows // max(T, 1)))
        else:
            b_blk = 1
            t_blk = min(T, max(8, (rows // 8) * 8))   # multiple of 8 when < T
        grid = (pl.cdiv(B, b_blk), pl.cdiv(T, t_blk))

        kernel = functools.partial(_specaug_kernel, m_F=self.m_F, m_T=self.m_T)
        return pl.pallas_call(
            kernel,
            out_shape=jax.ShapeDtypeStruct(img.shape, img.dtype),
            grid=grid,
            in_specs=[
                pl.BlockSpec(memory_space=pltpu.MemorySpace.SMEM),   # mask params (int32)
                pl.BlockSpec(memory_space=pltpu.MemorySpace.SMEM),   # fill values (f32[2])
                pl.BlockSpec((b_blk, t_blk, F), lambda b, t: (b, t, 0)),
            ],
            out_specs=pl.BlockSpec((b_blk, t_blk, F), lambda b, t: (b, t, 0)),
            compiler_params=pltpu.CompilerParams(
                dimension_semantics=("parallel", "parallel")),
        )(params, mvals, img)

    def _augment_from_key(self, img, key):
        _, T, F = img.shape
        params = self._draw_mask_params(key, T, F)
        mvals = self._mask_values(img, params)
        return self._augment_impl(img, params, mvals)

    # ---------- public API ----------
    def augment(self, img, key):
        return self._jit_augment(img, key)

    def _forward(self, img, key):
        kz, kmask = jax.random.split(key)
        z = jax.random.normal(kz, (), dtype=jnp.float32)
        gate = jnp.float32(self.p) >= z              # reference gate: p >= N(0,1)
        if self.W:
            # TODO(synk): time_warp / sparse_image_warp (TPS) not implemented; all W=0
            # policies (incl. the demo policy) never reach it, and the reference wraps
            # it in try/except and falls through on failure anyway.
            pass
        return lax.cond(gate,
                        lambda im: self._augment_from_key(im, kmask),
                        lambda im: im,
                        img)

    def __call__(self, img, key):
        return self._jit_forward(img, key)


if __name__ == "__main__":
    key = jax.random.PRNGKey(0)
    k_data, k_aug, k_forced = jax.random.split(key, 3)

    # Small mel-spectrogram: batch=2, time=64 frames, freq=128 mel bins.
    B, T, F = 2, 64, 128
    img = jax.random.normal(k_data, (B, T, F), dtype=jnp.float32)

    spec = SpecAugment(policy="icbhi_sup", mask="mean")

    out_gated = spec(img, k_aug)               # gated forward (exact module semantics)
    out_forced = spec.augment(img, k_forced)   # unconditional augment -> kernel runs
    jax.block_until_ready((out_gated, out_forced))

    assert out_gated.shape == img.shape and out_gated.dtype == img.dtype
    assert out_forced.shape == img.shape and out_forced.dtype == img.dtype

    # Self-check: Pallas kernel must match a plain-jnp application of the same masks
    # with the same fill values.
    params = spec._draw_mask_params(k_forced, T, F)
    mvals = spec._mask_values(img, params)
    ref = _reference_apply(img, params, mvals, spec.m_F, spec.m_T)
    assert bool(jnp.allclose(out_forced, ref, rtol=1e-5, atol=1e-5))

    print("KERNEL_OK")
</pallas_src>

<mosaic_0001>
module attributes {stable_mosaic.version = 11 : i64} {
  func.func @_specaug_kernel(%arg0: i32, %arg1: i32, %arg2: memref<8xi32, #tpu.memory_space<smem>>, %arg3: memref<2xf32, #tpu.memory_space<smem>>, %arg4: memref<2x64x128xf32, #tpu.memory_space<vmem>>, %arg5: memref<2x64x128xf32, #tpu.memory_space<vmem>>) attributes {dimension_semantics = [#tpu.dimension_semantics<parallel>, #tpu.dimension_semantics<parallel>], iteration_bounds = array<i64: 1, 1>, scalar_prefetch = 0 : i64, scratch_operands = 0 : i64, tpu.core_type = #tpu.core_type<tc>, window_params = [{transform_indices = @transform_0, window_bounds = array<i64: 8>}, {transform_indices = @transform_1, window_bounds = array<i64: 2>}, {transform_indices = @transform_2, window_bounds = array<i64: 2, 64, 128>}, {transform_indices = @transform_3, window_bounds = array<i64: 2, 64, 128>}]} {
    %c0 = arith.constant 0 : index
    %c0_0 = arith.constant 0 : index
    %c0_1 = arith.constant 0 : index
    %0 = vector.load %arg4[%c0, %c0_0, %c0_1] : memref<2x64x128xf32, #tpu.memory_space<vmem>>, vector<2x64x128xf32>
    %1 = tpu.iota {dimensions = array<i32: 2>} : vector<2x64x128xi32>
    %c0_2 = arith.constant 0 : index
    %2 = memref.load %arg2[%c0_2] : memref<8xi32, #tpu.memory_space<smem>>
    %c1 = arith.constant 1 : index
    %3 = memref.load %arg2[%c1] : memref<8xi32, #tpu.memory_space<smem>>
    %4 = vector.broadcast %2 : i32 to vector<2x64x128xi32>
    %5 = arith.cmpi sge, %1, %4 : vector<2x64x128xi32>
    %6 = arith.addi %2, %3 : i32
    %7 = vector.broadcast %6 : i32 to vector<2x64x128xi32>
    %8 = arith.cmpi slt, %1, %7 : vector<2x64x128xi32>
    %9 = arith.andi %5, %8 : vector<2x64x128xi1>
    %c2 = arith.constant 2 : index
    %10 = memref.load %arg2[%c2] : memref<8xi32, #tpu.memory_space<smem>>
    %c3 = arith.constant 3 : index
    %11 = memref.load %arg2[%c3] : memref<8xi32, #tpu.memory_space<smem>>
    %12 = vector.broadcast %10 : i32 to vector<2x64x128xi32>
    %13 = arith.cmpi sge, %1, %12 : vector<2x64x128xi32>
    %14 = arith.addi %10, %11 : i32
    %15 = vector.broadcast %14 : i32 to vector<2x64x128xi32>
    %16 = arith.cmpi slt, %1, %15 : vector<2x64x128xi32>
    %17 = arith.andi %13, %16 : vector<2x64x128xi1>
    %18 = arith.ori %9, %17 : vector<2x64x128xi1>
    %c0_3 = arith.constant 0 : index
    %19 = memref.load %arg3[%c0_3] : memref<2xf32, #tpu.memory_space<smem>>
    %20 = vector.broadcast %19 : f32 to vector<2x64x128xf32>
    %21 = arith.select %18, %20, %0 : vector<2x64x128xi1>, vector<2x64x128xf32>
    %c64_i32 = arith.constant 64 : i32
    %22 = arith.muli %arg1, %c64_i32 : i32
    %23 = tpu.iota {dimensions = array<i32: 1>} : vector<2x64x128xi32>
    %24 = vector.broadcast %22 : i32 to vector<2x64x128xi32>
    %25 = arith.addi %23, %24 : vector<2x64x128xi32>
    %c4 = arith.constant 4 : index
    %26 = memref.load %arg2[%c4] : memref<8xi32, #tpu.memory_space<smem>>
    %c5 = arith.constant 5 : index
    %27 = memref.load %arg2[%c5] : memref<8xi32, #tpu.memory_space<smem>>
    %28 = vector.broadcast %26 : i32 to vector<2x64x128xi32>
    %29 = arith.cmpi sge, %25, %28 : vector<2x64x128xi32>
    %30 = arith.addi %26, %27 : i32
    %31 = vector.broadcast %30 : i32 to vector<2x64x128xi32>
    %32 = arith.cmpi slt, %25, %31 : vector<2x64x128xi32>
    %33 = arith.andi %29, %32 : vector<2x64x128xi1>
    %c6 = arith.constant 6 : index
    %34 = memref.load %arg2[%c6] : memref<8xi32, #tpu.memory_space<smem>>
    %c7 = arith.constant 7 : index
    %35 = memref.load %arg2[%c7] : memref<8xi32, #tpu.memory_space<smem>>
    %36 = vector.broadcast %34 : i32 to vector<2x64x128xi32>
    %37 = arith.cmpi sge, %25, %36 : vector<2x64x128xi32>
    %38 = arith.addi %34, %35 : i32
    %39 = vector.broadcast %38 : i32 to vector<2x64x128xi32>
    %40 = arith.cmpi slt, %25, %39 : vector<2x64x128xi32>
    %41 = arith.andi %37, %40 : vector<2x64x128xi1>
    %42 = arith.ori %33, %41 : vector<2x64x128xi1>
    %c1_4 = arith.constant 1 : index
    %43 = memref.load %arg3[%c1_4] : memref<2xf32, #tpu.memory_space<smem>>
    %44 = vector.broadcast %43 : f32 to vector<2x64x128xf32>
    %45 = arith.select %42, %44, %21 : vector<2x64x128xi1>, vector<2x64x128xf32>
    %c0_5 = arith.constant 0 : index
    %c0_6 = arith.constant 0 : index
    %c0_7 = arith.constant 0 : index
    %46 = vector.load %arg5[%c0_5, %c0_6, %c0_7] : memref<2x64x128xf32, #tpu.memory_space<vmem>>, vector<2x64x128xf32>
    tpu.vector_store %arg5[%c0_5, %c0_6, %c0_7], %45 {strides = array<i32>} : memref<2x64x128xf32, #tpu.memory_space<vmem>>, vector<2x64x128xf32>,
    return
  }
  func.func @transform_0(%arg0: i32, %arg1: i32) -> i32 {
    %c0_i32 = arith.constant 0 : i32
    %c0_i32_0 = arith.constant 0 : i32
    return %c0_i32 : i32
  }
  func.func @transform_1(%arg0: i32, %arg1: i32) -> i32 {
    %c0_i32 = arith.constant 0 : i32
    %c0_i32_0 = arith.constant 0 : i32
    return %c0_i32 : i32
  }
  func.func @transform_2(%arg0: i32, %arg1: i32) -> (i32, i32, i32) {
    %c0_i32 = arith.constant 0 : i32
    %c0_i32_0 = arith.constant 0 : i32
    return %arg0, %arg1, %c0_i32 : i32, i32, i32
  }
  func.func @transform_3(%arg0: i32, %arg1: i32) -> (i32, i32, i32) {
    %c0_i32 = arith.constant 0 : i32
    %c0_i32_0 = arith.constant 0 : i32
    return %arg0, %arg1, %c0_i32 : i32, i32, i32
  }
}

</mosaic_0001>

<llo_original>
// kernel: branch_1_fun.1
$region0: #{branch_1_fun.1}
  #allocation0 [shape = 'u32[]', space=smem, size = 0x4, offset = 0x4, fixed_abs, tag = 'smem constant byte address 0x4 - core index']
  #allocation1 [shape = 'u32[144,128]{1,0:T(1,128)}', space=vmem, size = 0x12000, scoped, tag = 'internal scratch']
  %s0 = inlined_call_operand.vmem [shape: s32[8], index: 0, kind: input, shape index: {}]
  %s1 = inlined_call_operand.vmem [shape: f32[2], index: 1, kind: input, shape index: {}]
  %s2 = inlined_call_operand.vmem [shape: f32[2,64,128], index: 2, kind: input, shape index: {}]
  %s3 = inlined_call_operand.hbm [shape: f32[2,64,128], index: 3, kind: output, shape index: {}]
  %s4 = sld [smem:[#allocation0]]
  $region30: #{branch_1_fun.1} parent=0
    _
  %s6 = ssub.s32 1, %s4
  %s7 = scalar_select 0, %s6, %s4
  $region1: #{branch_1_fun.1} parent=0
    #allocation2 [shape = 'u8[512]{0}', space=smem, size = 0x200, scoped, tag = 'input window, operand 0, single buffered']
    #allocation3 [shape = 's32[1]{0}', space=sflag, size = 0x4, scoped, tag = 'scoped memory for branch_1_fun.1']
    #allocation4 [shape = 's32[1]{0}', space=sflag, size = 0x4, scoped, tag = 'scoped memory for branch_1_fun.1']
    #allocation5 [shape = 'u8[512]{0}', space=smem, size = 0x200, scoped, tag = 'input window, operand 1, single buffered']
    #allocation6 [shape = 's32[1]{0}', space=sflag, size = 0x4, scoped, tag = 'scoped memory for branch_1_fun.1']
    #allocation7 [shape = 'u8[65536]{0}', space=vmem, size = 0x10000, scoped, tag = 'output window, operand 0, single buffered']
    %8 = vsyncpa [#allocation4], 0
    %9 = vsyncpa [#allocation6], 0
    %10 = vsyncpa [#allocation3], 0
    // Predicated region
    $region2: #{branch_1_fun.1} parent=1 // pred_check
      _
    $region3: #{branch_1_fun.1} parent=1 // pred_check_branch
      %12 = sbr.rel (0) target = $region5
    $region4: #{branch_1_fun.1} parent=1 // pred_region
      %s14 = ssub.s32 16, 16
      %15 = vsyncadd [#allocation4], %s14
      %s17 = sshll.u32 %s0, 4
      %s18 = int_to_ptr.vmem [resolvable:$true] %s17
      %20 = dma.vmem_to_smem %s18, 16, [#allocation2], [#allocation4]
    $region5: #{branch_1_fun.1} parent=1 // pred_fallthru
      _
    // Predicated region
    $region6: #{branch_1_fun.1} parent=1 // pred_check
      _
    $region7: #{branch_1_fun.1} parent=1 // pred_check_branch
      %22 = sbr.rel (0) target = $region9
    $region8: #{branch_1_fun.1} parent=1 // pred_region
      %s24 = ssub.s32 16, 16
      %25 = vsyncadd [#allocation6], %s24
      %s27 = sshll.u32 %s1, 4
      %s28 = int_to_ptr.vmem [resolvable:$true] %s27
      %30 = dma.vmem_to_smem %s28, 16, [#allocation5], [#allocation6]
    $region9: #{branch_1_fun.1} parent=1 // pred_fallthru
      _
    // Predicated region
    $region10: #{branch_1_fun.1} parent=1 // pred_check
      _
    $region11: #{branch_1_fun.1} parent=1 // pred_check_branch
      %32 = sbr.rel (0) target = $region13
    $region12: #{branch_1_fun.1} parent=1 // pred_region
      _
    $region13: #{branch_1_fun.1} parent=1 // pred_fallthru
      _
    // Predicated region
    $region14: #{branch_1_fun.1} parent=1 // pred_check
      _
    $region15: #{branch_1_fun.1} parent=1 // pred_check_branch
      %34 = sbr.rel (0) target = $region17
    $region16: #{branch_1_fun.1} parent=1 // pred_region
      %35 = dma.done [#allocation4], 16
    $region17: #{branch_1_fun.1} parent=1 // pred_fallthru
      _
    // Predicated region
    $region18: #{branch_1_fun.1} parent=1 // pred_check
      _
    $region19: #{branch_1_fun.1} parent=1 // pred_check_branch
      %37 = sbr.rel (0) target = $region21
    $region20: #{branch_1_fun.1} parent=1 // pred_region
      %38 = dma.done [#allocation6], 16
    $region21: #{branch_1_fun.1} parent=1 // pred_fallthru
      _
    %39 = sfence
    %v40 = vld [vmem:[%s2] sm:$0xff]
    %v41 = vld [vmem:[%s2 + $0x8] sm:$0xff]
    %v42 = vld [vmem:[%s2 + $0x10] sm:$0xff]
    %v43 = vld [vmem:[%s2 + $0x18] sm:$0xff]
    %v44 = vld [vmem:[%s2 + $0x20] sm:$0xff]
    %v45 = vld [vmem:[%s2 + $0x28] sm:$0xff]
    %v46 = vld [vmem:[%s2 + $0x30] sm:$0xff]
    %v47 = vld [vmem:[%s2 + $0x38] sm:$0xff]
    %v48 = vld [vmem:[%s2 + $0x40] sm:$0xff]
    %v49 = vld [vmem:[%s2 + $0x48] sm:$0xff]
    %v50 = vld [vmem:[%s2 + $0x50] sm:$0xff]
    %v51 = vld [vmem:[%s2 + $0x58] sm:$0xff]
    %v52 = vld [vmem:[%s2 + $0x60] sm:$0xff]
    %v53 = vld [vmem:[%s2 + $0x68] sm:$0xff]
    %v54 = vld [vmem:[%s2 + $0x70] sm:$0xff]
    %v55 = vld [vmem:[%s2 + $0x78] sm:$0xff]
    %v56 = vlaneseq
    %v57 = vand.u32 %v56, 127
    %s58 = sld [smem:[#allocation2]]
    %s59 = sld [smem:[#allocation2 + $0x1]]
    %v60 = vstv %s58
    %vm61 = vcmp.ge.s32.totalorder %v57, %v60
    %s62 = sadd.s32 %s58, %s59
    %v63 = vstv %s62
    %vm64 = vcmp.lt.s32.totalorder %v57, %v63
    %vm65 = vmand %vm61, %vm64
    %s66 = sld [smem:[#allocation2 + $0x2]]
    %s67 = sld [smem:[#allocation2 + $0x3]]
    %v68 = vstv %s66
    %vm69 = vcmp.ge.s32.totalorder %v57, %v68
    %s70 = sadd.s32 %s66, %s67
    %v71 = vstv %s70
    %vm72 = vcmp.lt.s32.totalorder %v57, %v71
    %vm73 = vmand %vm69, %vm72
    %vm74 = vmor %vm65, %vm73
    %s75 = sld [smem:[#allocation5]]
    %v76 = vstv %s75
    %v77 = vsel %vm74, %v76, %v40
    %v78 = vsel %vm74, %v76, %v41
    %v79 = vsel %vm74, %v76, %v42
    %v80 = vsel %vm74, %v76, %v43
    %v81 = vsel %vm74, %v76, %v44
    %v82 = vsel %vm74, %v76, %v45
    %v83 = vsel %vm74, %v76, %v46
    %v84 = vsel %vm74, %v76, %v47
    %v85 = vsel %vm74, %v76, %v48
    %v86 = vsel %vm74, %v76, %v49
    %v87 = vsel %vm74, %v76, %v50
    %v88 = vsel %vm74, %v76, %v51
    %v89 = vsel %vm74, %v76, %v52
    %v90 = vsel %vm74, %v76, %v53
    %v91 = vsel %vm74, %v76, %v54
    %v92 = vsel %vm74, %v76, %v55
    %s93 = smul.u32 0, 64
    %v94 = vlaneseq
    %v95 = vshrl.u32 %v94, 7
    %v96 = vadd.s32 %v95, 8
    %v97 = vadd.s32 %v95, 16
    %v98 = vadd.s32 %v95, 24
    %v99 = vadd.s32 %v95, 32
    %v100 = vadd.s32 %v95, 40
    %v101 = vadd.s32 %v95, 48
    %v102 = vadd.s32 %v95, 56
    %v103 = vstv %s93
    %v104 = vadd.s32 %v95, %v103
    %v105 = vadd.s32 %v96, %v103
    %v106 = vadd.s32 %v97, %v103
    %v107 = vadd.s32 %v98, %v103
    %v108 = vadd.s32 %v99, %v103
    %v109 = vadd.s32 %v100, %v103
    %v110 = vadd.s32 %v101, %v103
    %v111 = vadd.s32 %v102, %v103
    %s112 = sld [smem:[#allocation2 + $0x4]]
    %s113 = sld [smem:[#allocation2 + $0x5]]
    %v114 = vstv %s112
    %vm115 = vcmp.ge.s32.totalorder %v104, %v114
    %vm116 = vcmp.ge.s32.totalorder %v105, %v114
    %vm117 = vcmp.ge.s32.totalorder %v106, %v114
    %vm118 = vcmp.ge.s32.totalorder %v107, %v114
    %vm119 = vcmp.ge.s32.totalorder %v108, %v114
    %vm120 = vcmp.ge.s32.totalorder %v109, %v114
    %vm121 = vcmp.ge.s32.totalorder %v110, %v114
    %vm122 = vcmp.ge.s32.totalorder %v111, %v114
    %s123 = sadd.s32 %s112, %s113
    %v124 = vstv %s123
    %vm125 = vcmp.lt.s32.totalorder %v104, %v124
    %vm126 = vcmp.lt.s32.totalorder %v105, %v124
    %vm127 = vcmp.lt.s32.totalorder %v106, %v124
    %vm128 = vcmp.lt.s32.totalorder %v107, %v124
    %vm129 = vcmp.lt.s32.totalorder %v108, %v124
    %vm130 = vcmp.lt.s32.totalorder %v109, %v124
    %vm131 = vcmp.lt.s32.totalorder %v110, %v124
    %vm132 = vcmp.lt.s32.totalorder %v111, %v124
    %vm133 = vmand %vm115, %vm125
    %vm134 = vmand %vm116, %vm126
    %vm135 = vmand %vm117, %vm127
    %vm136 = vmand %vm118, %vm128
    %vm137 = vmand %vm119, %vm129
    %vm138 = vmand %vm120, %vm130
    %vm139 = vmand %vm121, %vm131
    %vm140 = vmand %vm122, %vm132
    %s141 = sld [smem:[#allocation2 + $0x6]]
    %s142 = sld [smem:[#allocation2 + $0x7]]
    %v143 = vstv %s141
    %vm144 = vcmp.ge.s32.totalorder %v104, %v143
    %vm145 = vcmp.ge.s32.totalorder %v105, %v143
    %vm146 = vcmp.ge.s32.totalorder %v106, %v143
    %vm147 = vcmp.ge.s32.totalorder %v107, %v143
    %vm148 = vcmp.ge.s32.totalorder %v108, %v143
    %vm149 = vcmp.ge.s32.totalorder %v109, %v143
    %vm150 = vcmp.ge.s32.totalorder %v110, %v143
    %vm151 = vcmp.ge.s32.totalorder %v111, %v143
    %s152 = sadd.s32 %s141, %s142
    %v153 = vstv %s152
    %vm154 = vcmp.lt.s32.totalorder %v104, %v153
    %vm155 = vcmp.lt.s32.totalorder %v105, %v153
    %vm156 = vcmp.lt.s32.totalorder %v106, %v153
    %vm157 = vcmp.lt.s32.totalorder %v107, %v153
    %vm158 = vcmp.lt.s32.totalorder %v108, %v153
    %vm159 = vcmp.lt.s32.totalorder %v109, %v153
    %vm160 = vcmp.lt.s32.totalorder %v110, %v153
    %vm161 = vcmp.lt.s32.totalorder %v111, %v153
    %vm162 = vmand %vm144, %vm154
    %vm163 = vmand %vm145, %vm155
    %vm164 = vmand %vm146, %vm156
    %vm165 = vmand %vm147, %vm157
    %vm166 = vmand %vm148, %vm158
    %vm167 = vmand %vm149, %vm159
    %vm168 = vmand %vm150, %vm160
    %vm169 = vmand %vm151, %vm161
    %vm170 = vmor %vm133, %vm162
    %vm171 = vmor %vm134, %vm163
    %vm172 = vmor %vm135, %vm164
    %vm173 = vmor %vm136, %vm165
    %vm174 = vmor %vm137, %vm166
    %vm175 = vmor %vm138, %vm167
    %vm176 = vmor %vm139, %vm168
    %vm177 = vmor %vm140, %vm169
    %s178 = sld [smem:[#allocation5 + $0x1]]
    %v179 = vstv %s178
    %v180 = vsel %vm170, %v179, %v77
    %v181 = vsel %vm171, %v179, %v78
    %v182 = vsel %vm172, %v179, %v79
    %v183 = vsel %vm173, %v179, %v80
    %v184 = vsel %vm174, %v179, %v81
    %v185 = vsel %vm175, %v179, %v82
    %v186 = vsel %vm176, %v179, %v83
    %v187 = vsel %vm177, %v179, %v84
    %v188 = vsel %vm170, %v179, %v85
    %v189 = vsel %vm171, %v179, %v86
    %v190 = vsel %vm172, %v179, %v87
    %v191 = vsel %vm173, %v179, %v88
    %v192 = vsel %vm174, %v179, %v89
    %v193 = vsel %vm175, %v179, %v90
    %v194 = vsel %vm176, %v179, %v91
    %v195 = vsel %vm177, %v179, %v92
    %196 = vst [vmem:[#allocation7] sm:$0xff] %v180
    %197 = vst [vmem:[#allocation7 + $0x8] sm:$0xff] %v181
    %198 = vst [vmem:[#allocation7 + $0x10] sm:$0xff] %v182
    %199 = vst [vmem:[#allocation7 + $0x18] sm:$0xff] %v183
    %200 = vst [vmem:[#allocation7 + $0x20] sm:$0xff] %v184
    %201 = vst [vmem:[#allocation7 + $0x28] sm:$0xff] %v185
    %202 = vst [vmem:[#allocation7 + $0x30] sm:$0xff] %v186
    %203 = vst [vmem:[#allocation7 + $0x38] sm:$0xff] %v187
    %204 = vst [vmem:[#allocation7 + $0x40] sm:$0xff] %v188
    %205 = vst [vmem:[#allocation7 + $0x48] sm:$0xff] %v189
    %206 = vst [vmem:[#allocation7 + $0x50] sm:$0xff] %v190
    %207 = vst [vmem:[#allocation7 + $0x58] sm:$0xff] %v191
    %208 = vst [vmem:[#allocation7 + $0x60] sm:$0xff] %v192
    %209 = vst [vmem:[#allocation7 + $0x68] sm:$0xff] %v193
    %210 = vst [vmem:[#allocation7 + $0x70] sm:$0xff] %v194
    %211 = vst [vmem:[#allocation7 + $0x78] sm:$0xff] %v195
    // Predicated region
    $region22: #{branch_1_fun.1} parent=1 // pred_check
      _
    $region23: #{branch_1_fun.1} parent=1 // pred_check_branch
      %213 = sbr.rel (0) target = $region25
    $region24: #{branch_1_fun.1} parent=1 // pred_region
      %s215 = ssub.s32 2048, 2048
      %216 = vsyncadd [#allocation3], %s215
      %s217 = sshll.u32 [#allocation7], 4
      %s218 = int_to_ptr.vmem [resolvable:$true] %s217
      %223 = dma.vmem_to_hbm [thread:$0]  %s218, 2048, %s3, [#allocation3], 128, 128, 8
    $region25: #{branch_1_fun.1} parent=1 // pred_fallthru
      _
    // Predicated region
    $region26: #{branch_1_fun.1} parent=1 // pred_check
      _
    $region27: #{branch_1_fun.1} parent=1 // pred_check_branch
      %225 = sbr.rel (0) target = $region29
    $region28: #{branch_1_fun.1} parent=1 // pred_region
      %226 = dma.done [#allocation3], 2048
    $region29: #{branch_1_fun.1} parent=1 // pred_fallthru
      _
    %227 = vsyncpa [#allocation3], 1
    %228 = vsyncpa [#allocation4], 1
    %229 = vsyncpa [#allocation6], 1

</llo_original>
